<compile_context>
chip_gen: v6e
topology: v6e:2x2x1
jax: 0.10.0
libtpu: 0.0.40
codegen_flags: <defaults>
</compile_context>

<pallas_src>
import functools

import jax
import jax.numpy as jnp
from jax.experimental import pallas as pl
from jax.experimental.pallas import tpu as pltpu


def _round_up(x, m):
    return (x + m - 1) // m * m


# ---------------------------------------------------------------------------
# Kernel
# ---------------------------------------------------------------------------
def gru221_kernel(x_ref, h1_ref, h2_ref,
                  wi_ref, wh1_ref, wh2_ref,
                  bi_ref, bh_ref,
                  out_ref, *, hp):
    # Two wide MXU matmuls (f32 accumulation), biases added in f32.
    gates_i = jnp.dot(x_ref[...], wi_ref[...],
                      preferred_element_type=jnp.float32) + bi_ref[...]
    gates_h = (jnp.dot(h1_ref[...], wh1_ref[...],
                       preferred_element_type=jnp.float32)
               + jnp.dot(h2_ref[...], wh2_ref[...],
                         preferred_element_type=jnp.float32)
               + bh_ref[...])

    # Gate column blocks are Hp-wide (128-aligned) -> lane-dense slices.
    r = jax.nn.sigmoid(gates_i[:, 0 * hp:1 * hp] + gates_h[:, 0 * hp:1 * hp])
    z = jax.nn.sigmoid(gates_i[:, 1 * hp:2 * hp] + gates_h[:, 1 * hp:2 * hp])
    n = jnp.tanh(gates_i[:, 2 * hp:3 * hp] + r * gates_h[:, 2 * hp:3 * hp])

    # (1-z)*n + z/2*h1 + z/2*h2  ==  n + z*(0.5*(h1+h2) - n)   (fewer VPU muls)
    h_mean = 0.5 * (h1_ref[...].astype(jnp.float32)
                    + h2_ref[...].astype(jnp.float32))
    out = n + z * (h_mean - n)
    out_ref[...] = out.astype(out_ref.dtype)


# ---------------------------------------------------------------------------
# Wrapper
# ---------------------------------------------------------------------------
@functools.partial(jax.jit, static_argnames=("compute_dtype", "tm_max"))
def gru221_forward(x, h1, h2, params, *,
                   compute_dtype=jnp.float32, tm_max=512):
    """x: (B, S, In), h1/h2: (B, S, H)  ->  (B, S, H)."""
    B, S, In = x.shape
    H = h1.shape[-1]
    M = B * S

    Hp = _round_up(H, 128)                      # lane-dense gate / output width
    # Row tile: sublane-aligned and chosen to split M evenly (minimal padding).
    max_tm = min(tm_max, _round_up(M, 8))
    n_tiles = pl.cdiv(M, max_tm)
    TM = _round_up(pl.cdiv(M, n_tiles), 8)
    Mp = n_tiles * TM
    out_dtype = x.dtype

    def pad2(a, rows, cols):
        return jnp.pad(a, ((0, rows - a.shape[0]), (0, cols - a.shape[1])))

    # Activations: flatten (B,S) -> M, pad rows to Mp and H -> Hp with zeros.
    x2 = pad2(x.reshape(M, In), Mp, In).astype(compute_dtype)
    h1_2 = pad2(h1.reshape(M, H), Mp, Hp).astype(compute_dtype)
    h2_2 = pad2(h2.reshape(M, H), Mp, Hp).astype(compute_dtype)

    # Fused, gate-blocked weights.  Column layout of the 3*Hp outputs:
    #   [0:Hp) -> r,  [Hp:2Hp) -> z,  [2Hp:3Hp) -> n   (actual data in [:H]).
    def gate_cols(w_t):                         # (k, H) -> (k, Hp)
        return jnp.pad(w_t, ((0, 0), (0, Hp - H)))

    wi = jnp.concatenate([gate_cols(params["wir_w"].T),
                          gate_cols(params["wiz_w"].T),
                          gate_cols(params["win_w"].T)], axis=1)       # (In, 3Hp)

    whr_t, whz_t, whn_t = (params["whr_w"].T, params["whz_w"].T,
                           params["whn_w"].T)                          # (2H, H)
    wh1 = jnp.concatenate([gate_cols(whr_t[:H]), gate_cols(whz_t[:H]),
                           gate_cols(whn_t[:H])], axis=1)              # (H, 3Hp)
    wh2 = jnp.concatenate([gate_cols(whr_t[H:]), gate_cols(whz_t[H:]),
                           gate_cols(whn_t[H:])], axis=1)
    wh1 = jnp.pad(wh1, ((0, Hp - H), (0, 0)))                          # (Hp, 3Hp)
    wh2 = jnp.pad(wh2, ((0, Hp - H), (0, 0)))

    wi = wi.astype(compute_dtype)
    wh1 = wh1.astype(compute_dtype)
    wh2 = wh2.astype(compute_dtype)

    def gate_bias(b):                           # (H,) -> (1, Hp)
        return jnp.pad(b, (0, Hp - H)).reshape(1, Hp)

    bi = jnp.concatenate([gate_bias(params["wir_b"]),
                          gate_bias(params["wiz_b"]),
                          gate_bias(params["win_b"])], axis=1).astype(jnp.float32)
    bh = jnp.concatenate([gate_bias(params["whr_b"]),
                          gate_bias(params["whz_b"]),
                          gate_bias(params["whn_b"])], axis=1).astype(jnp.float32)

    grid = (Mp // TM,)

    def row_spec(shape):                        # tiled over M
        return pl.BlockSpec(shape, lambda i: (i, 0))

    def resident_spec(shape):                   # DMA'd once, resident across grid
        return pl.BlockSpec(shape, lambda i: (0, 0))

    out2 = pl.pallas_call(
        functools.partial(gru221_kernel, hp=Hp),
        out_shape=jax.ShapeDtypeStruct((Mp, Hp), out_dtype),
        grid=grid,
        in_specs=[
            row_spec((TM, In)),                 # x
            row_spec((TM, Hp)),                 # h1
            row_spec((TM, Hp)),                 # h2
            resident_spec((In, 3 * Hp)),        # Wi
            resident_spec((Hp, 3 * Hp)),        # Wh (h1 half)
            resident_spec((Hp, 3 * Hp)),        # Wh (h2 half)
            resident_spec((1, 3 * Hp)),         # input-side biases
            resident_spec((1, 3 * Hp)),         # hidden-side biases
        ],
        out_specs=row_spec((TM, Hp)),
        compiler_params=pltpu.CompilerParams(
            dimension_semantics=("parallel",)),
    )(x2, h1_2, h2_2, wi, wh1, wh2, bi, bh)

    return out2[:M, :H].reshape(B, S, H)


# ---------------------------------------------------------------------------
# Params / reference
# ---------------------------------------------------------------------------
def xavier_uniform(key, out_features, in_features):
    limit = jnp.sqrt(6.0 / (in_features + out_features))
    return jax.random.uniform(key, (out_features, in_features),
                              jnp.float32, -limit, limit)


def init_params(key, input_size, hidden_size):
    keys = jax.random.split(key, 12)
    H, In, H2 = hidden_size, input_size, 2 * hidden_size

    def bias(k, fan_in):
        bound = 1.0 / jnp.sqrt(fan_in)
        return jax.random.uniform(k, (H,), jnp.float32, -bound, bound)

    return {
        "wir_w": xavier_uniform(keys[0], H, In),  "wir_b": bias(keys[1], In),
        "whr_w": xavier_uniform(keys[2], H, H2),  "whr_b": bias(keys[3], H2),
        "wiz_w": xavier_uniform(keys[4], H, In),  "wiz_b": bias(keys[5], In),
        "whz_w": xavier_uniform(keys[6], H, H2),  "whz_b": bias(keys[7], H2),
        "win_w": xavier_uniform(keys[8], H, In),  "win_b": bias(keys[9], In),
        "whn_w": xavier_uniform(keys[10], H, H2), "whn_b": bias(keys[11], H2),
    }


def reference_forward(x, h1, h2, p):
    h = jnp.concatenate([h1, h2], axis=2)

    def lin(inp, w, b):
        return inp @ w.T + b

    r = jax.nn.sigmoid(lin(x, p["wir_w"], p["wir_b"]) + lin(h, p["whr_w"], p["whr_b"]))
    z = jax.nn.sigmoid(lin(x, p["wiz_w"], p["wiz_b"]) + lin(h, p["whz_w"], p["whz_b"]))
    n = jnp.tanh(lin(x, p["win_w"], p["win_b"]) + r * lin(h, p["whn_w"], p["whn_b"]))
    return (1.0 - z) * n + z / 2 * h1 + z / 2 * h2


# ---------------------------------------------------------------------------
# Test
# ---------------------------------------------------------------------------
if __name__ == "__main__":
    input_size, hidden_size = 16, 32
    key = jax.random.PRNGKey(0)
    kx, kh1, kh2, kp = jax.random.split(key, 4)
    params = init_params(kp, input_size, hidden_size)

    # Small shapes consistent with the module.
    B, S = 2, 8
    x = jax.random.normal(kx, (B, S, input_size), jnp.float32)
    h1 = jax.random.normal(kh1, (B, S, hidden_size), jnp.float32)
    h2 = jax.random.normal(kh2, (B, S, hidden_size), jnp.float32)

    out = jax.block_until_ready(gru221_forward(x, h1, h2, params))
    ref = reference_forward(x, h1, h2, params)
    assert out.shape == (B, S, hidden_size)
    assert jnp.allclose(out, ref, atol=2e-5, rtol=2e-5)

    # Multi-tile path: exercises the M grid, row tiling, and megacore sharding.
    B2, S2 = 4, 160                         # M = 640 -> 2 grid steps at TM=320
    x_l = jax.random.normal(kx, (B2, S2, input_size), jnp.float32)
    h1_l = jax.random.normal(kh1, (B2, S2, hidden_size), jnp.float32)
    h2_l = jax.random.normal(kh2, (B2, S2, hidden_size), jnp.float32)
    out_l = jax.block_until_ready(gru221_forward(x_l, h1_l, h2_l, params))
    ref_l = reference_forward(x_l, h1_l, h2_l, params)
    assert jnp.allclose(out_l, ref_l, atol=2e-5, rtol=2e-5)

    # bf16 matmul inputs (f32 accumulation + f32 epilogue) — memory-bound path.
    out_bf16 = jax.block_until_ready(
        gru221_forward(x_l, h1_l, h2_l, params, compute_dtype=jnp.bfloat16))
    assert jnp.allclose(out_bf16, ref_l, atol=1e-1, rtol=1e-1)

    print("KERNEL_OK")
</pallas_src>

<mosaic_0001>
module attributes {stable_mosaic.version = 11 : i64} {
  func.func @gru221_kernel(%arg0: i32, %arg1: memref<16x16xf32, #tpu.memory_space<vmem>>, %arg2: memref<16x128xf32, #tpu.memory_space<vmem>>, %arg3: memref<16x128xf32, #tpu.memory_space<vmem>>, %arg4: memref<16x384xf32, #tpu.memory_space<vmem>>, %arg5: memref<128x384xf32, #tpu.memory_space<vmem>>, %arg6: memref<128x384xf32, #tpu.memory_space<vmem>>, %arg7: memref<1x384xf32, #tpu.memory_space<vmem>>, %arg8: memref<1x384xf32, #tpu.memory_space<vmem>>, %arg9: memref<16x128xf32, #tpu.memory_space<vmem>>) attributes {dimension_semantics = [#tpu.dimension_semantics<parallel>], iteration_bounds = array<i64: 1>, scalar_prefetch = 0 : i64, scratch_operands = 0 : i64, tpu.core_type = #tpu.core_type<tc>, window_params = [{transform_indices = @transform_0, window_bounds = array<i64: 16, 16>}, {transform_indices = @transform_1, window_bounds = array<i64: 16, 128>}, {transform_indices = @transform_2, window_bounds = array<i64: 16, 128>}, {pipeline_mode = #tpu.pipeline_mode<synchronous>, transform_indices = @transform_3, window_bounds = array<i64: 16, 384>}, {pipeline_mode = #tpu.pipeline_mode<synchronous>, transform_indices = @transform_4, window_bounds = array<i64: 128, 384>}, {pipeline_mode = #tpu.pipeline_mode<synchronous>, transform_indices = @transform_5, window_bounds = array<i64: 128, 384>}, {pipeline_mode = #tpu.pipeline_mode<synchronous>, transform_indices = @transform_6, window_bounds = array<i64: 1, 384>}, {pipeline_mode = #tpu.pipeline_mode<synchronous>, transform_indices = @transform_7, window_bounds = array<i64: 1, 384>}, {transform_indices = @transform_8, window_bounds = array<i64: 16, 128>}]} {
    %c0 = arith.constant 0 : index
    %c0_0 = arith.constant 0 : index
    %0 = vector.load %arg1[%c0, %c0_0] : memref<16x16xf32, #tpu.memory_space<vmem>>, vector<16x16xf32>
    %c0_1 = arith.constant 0 : index
    %c0_2 = arith.constant 0 : index
    %1 = vector.load %arg4[%c0_1, %c0_2] : memref<16x384xf32, #tpu.memory_space<vmem>>, vector<16x384xf32>
    %cst = arith.constant dense<0.000000e+00> : vector<16x384xf32>
    %2 = tpu.matmul %0, %1, %cst {dimension_numbers = #tpu.dot_dimension_numbers<[1], [0], [0], [1], [0, 0, 1, 1], [], []>} : vector<16x16xf32>, vector<16x384xf32>, vector<16x384xf32> -> vector<16x384xf32>
    %c0_3 = arith.constant 0 : index
    %c0_4 = arith.constant 0 : index
    %3 = vector.load %arg7[%c0_3, %c0_4] : memref<1x384xf32, #tpu.memory_space<vmem>>, vector<1x384xf32>
    %4 = vector.broadcast %3 : vector<1x384xf32> to vector<16x384xf32>
    %5 = arith.addf %2, %4 : vector<16x384xf32>
    %c0_5 = arith.constant 0 : index
    %c0_6 = arith.constant 0 : index
    %6 = vector.load %arg2[%c0_5, %c0_6] : memref<16x128xf32, #tpu.memory_space<vmem>>, vector<16x128xf32>
    %c0_7 = arith.constant 0 : index
    %c0_8 = arith.constant 0 : index
    %7 = vector.load %arg5[%c0_7, %c0_8] : memref<128x384xf32, #tpu.memory_space<vmem>>, vector<128x384xf32>
    %cst_9 = arith.constant dense<0.000000e+00> : vector<16x384xf32>
    %8 = tpu.matmul %6, %7, %cst_9 {dimension_numbers = #tpu.dot_dimension_numbers<[1], [0], [0], [1], [0, 0, 1, 1], [], []>} : vector<16x128xf32>, vector<128x384xf32>, vector<16x384xf32> -> vector<16x384xf32>
    %c0_10 = arith.constant 0 : index
    %c0_11 = arith.constant 0 : index
    %9 = vector.load %arg3[%c0_10, %c0_11] : memref<16x128xf32, #tpu.memory_space<vmem>>, vector<16x128xf32>
    %c0_12 = arith.constant 0 : index
    %c0_13 = arith.constant 0 : index
    %10 = vector.load %arg6[%c0_12, %c0_13] : memref<128x384xf32, #tpu.memory_space<vmem>>, vector<128x384xf32>
    %cst_14 = arith.constant dense<0.000000e+00> : vector<16x384xf32>
    %11 = tpu.matmul %9, %10, %cst_14 {dimension_numbers = #tpu.dot_dimension_numbers<[1], [0], [0], [1], [0, 0, 1, 1], [], []>} : vector<16x128xf32>, vector<128x384xf32>, vector<16x384xf32> -> vector<16x384xf32>
    %12 = arith.addf %8, %11 : vector<16x384xf32>
    %c0_15 = arith.constant 0 : index
    %c0_16 = arith.constant 0 : index
    %13 = vector.load %arg8[%c0_15, %c0_16] : memref<1x384xf32, #tpu.memory_space<vmem>>, vector<1x384xf32>
    %14 = vector.broadcast %13 : vector<1x384xf32> to vector<16x384xf32>
    %15 = arith.addf %12, %14 : vector<16x384xf32>
    %16 = vector.extract_strided_slice %5 {offsets = [0, 0], sizes = [16, 128], strides = [1, 1]} : vector<16x384xf32> to vector<16x128xf32>
    %17 = vector.extract_strided_slice %15 {offsets = [0, 0], sizes = [16, 128], strides = [1, 1]} : vector<16x384xf32> to vector<16x128xf32>
    %18 = arith.addf %16, %17 : vector<16x128xf32>
    %19 = arith.negf %18 : vector<16x128xf32>
    %20 = math.exp %19 : vector<16x128xf32>
    %cst_17 = arith.constant 1.000000e+00 : f32
    %21 = vector.broadcast %cst_17 : f32 to vector<16x128xf32>
    %22 = arith.addf %21, %20 : vector<16x128xf32>
    %23 = arith.divf %21, %22 : vector<16x128xf32>
    %24 = vector.extract_strided_slice %5 {offsets = [0, 128], sizes = [16, 128], strides = [1, 1]} : vector<16x384xf32> to vector<16x128xf32>
    %25 = vector.extract_strided_slice %15 {offsets = [0, 128], sizes = [16, 128], strides = [1, 1]} : vector<16x384xf32> to vector<16x128xf32>
    %26 = arith.addf %24, %25 : vector<16x128xf32>
    %27 = arith.negf %26 : vector<16x128xf32>
    %28 = math.exp %27 : vector<16x128xf32>
    %cst_18 = arith.constant 1.000000e+00 : f32
    %29 = vector.broadcast %cst_18 : f32 to vector<16x128xf32>
    %30 = arith.addf %29, %28 : vector<16x128xf32>
    %31 = arith.divf %29, %30 : vector<16x128xf32>
    %32 = vector.extract_strided_slice %5 {offsets = [0, 256], sizes = [16, 128], strides = [1, 1]} : vector<16x384xf32> to vector<16x128xf32>
    %33 = vector.extract_strided_slice %15 {offsets = [0, 256], sizes = [16, 128], strides = [1, 1]} : vector<16x384xf32> to vector<16x128xf32>
    %34 = arith.mulf %23, %33 : vector<16x128xf32>
    %35 = arith.addf %32, %34 : vector<16x128xf32>
    %36 = math.tanh %35 : vector<16x128xf32>
    %c0_19 = arith.constant 0 : index
    %c0_20 = arith.constant 0 : index
    %37 = vector.load %arg2[%c0_19, %c0_20] : memref<16x128xf32, #tpu.memory_space<vmem>>, vector<16x128xf32>
    %c0_21 = arith.constant 0 : index
    %c0_22 = arith.constant 0 : index
    %38 = vector.load %arg3[%c0_21, %c0_22] : memref<16x128xf32, #tpu.memory_space<vmem>>, vector<16x128xf32>
    %39 = arith.addf %37, %38 : vector<16x128xf32>
    %cst_23 = arith.constant 5.000000e-01 : f32
    %40 = vector.broadcast %cst_23 : f32 to vector<16x128xf32>
    %41 = arith.mulf %40, %39 : vector<16x128xf32>
    %42 = arith.subf %41, %36 : vector<16x128xf32>
    %43 = arith.mulf %31, %42 : vector<16x128xf32>
    %44 = arith.addf %36, %43 : vector<16x128xf32>
    %c0_24 = arith.constant 0 : index
    %c0_25 = arith.constant 0 : index
    %45 = vector.load %arg9[%c0_24, %c0_25] : memref<16x128xf32, #tpu.memory_space<vmem>>, vector<16x128xf32>
    tpu.vector_store %arg9[%c0_24, %c0_25], %44 {strides = array<i32>} : memref<16x128xf32, #tpu.memory_space<vmem>>, vector<16x128xf32>,
    return
  }
  func.func @transform_0(%arg0: i32) -> (i32, i32) {
    %c0_i32 = arith.constant 0 : i32
    %c0_i32_0 = arith.constant 0 : i32
    return %arg0, %c0_i32 : i32, i32
  }
  func.func @transform_1(%arg0: i32) -> (i32, i32) {
    %c0_i32 = arith.constant 0 : i32
    %c0_i32_0 = arith.constant 0 : i32
    return %arg0, %c0_i32 : i32, i32
  }
  func.func @transform_2(%arg0: i32) -> (i32, i32) {
    %c0_i32 = arith.constant 0 : i32
    %c0_i32_0 = arith.constant 0 : i32
    return %arg0, %c0_i32 : i32, i32
  }
  func.func @transform_3(%arg0: i32) -> (i32, i32) {
    %c0_i32 = arith.constant 0 : i32
    %c0_i32_0 = arith.constant 0 : i32
    %c0_i32_1 = arith.constant 0 : i32
    return %c0_i32, %c0_i32_0 : i32, i32
  }
  func.func @transform_4(%arg0: i32) -> (i32, i32) {
    %c0_i32 = arith.constant 0 : i32
    %c0_i32_0 = arith.constant 0 : i32
    %c0_i32_1 = arith.constant 0 : i32
    return %c0_i32, %c0_i32_0 : i32, i32
  }
  func.func @transform_5(%arg0: i32) -> (i32, i32) {
    %c0_i32 = arith.constant 0 : i32
    %c0_i32_0 = arith.constant 0 : i32
    %c0_i32_1 = arith.constant 0 : i32
    return %c0_i32, %c0_i32_0 : i32, i32
  }
  func.func @transform_6(%arg0: i32) -> (i32, i32) {
    %c0_i32 = arith.constant 0 : i32
    %c0_i32_0 = arith.constant 0 : i32
    %c0_i32_1 = arith.constant 0 : i32
    return %c0_i32, %c0_i32_0 : i32, i32
  }
  func.func @transform_7(%arg0: i32) -> (i32, i32) {
    %c0_i32 = arith.constant 0 : i32
    %c0_i32_0 = arith.constant 0 : i32
    %c0_i32_1 = arith.constant 0 : i32
    return %c0_i32, %c0_i32_0 : i32, i32
  }
  func.func @transform_8(%arg0: i32) -> (i32, i32) {
    %c0_i32 = arith.constant 0 : i32
    %c0_i32_0 = arith.constant 0 : i32
    return %arg0, %c0_i32 : i32, i32
  }
}

</mosaic_0001>

<llo_original>
// kernel: gru221_forward.1
$region0: #{gru221_forward.1}
  #allocation0 [shape = 'u32[]', space=smem, size = 0x4, offset = 0x4, fixed_abs, tag = 'smem constant byte address 0x4 - core index']
  #allocation1 [shape = 'u32[144,128]{1,0:T(1,128)}', space=vmem, size = 0x12000, scoped, tag = 'internal scratch']
  %s0 = inlined_call_operand.vmem [shape: f32[16,16], index: 0, kind: input, shape index: {}]
  %s1 = inlined_call_operand.vmem [shape: f32[16,128], index: 1, kind: input, shape index: {}]
  %s2 = inlined_call_operand.vmem [shape: f32[16,128], index: 2, kind: input, shape index: {}]
  %s3 = inlined_call_operand.vmem [shape: f32[16,384], index: 3, kind: input, shape index: {}]
  %s4 = inlined_call_operand.vmem [shape: f32[128,384], index: 4, kind: input, shape index: {}]
  %s5 = inlined_call_operand.vmem [shape: f32[128,384], index: 5, kind: input, shape index: {}]
  %s6 = inlined_call_operand.vmem [shape: f32[1,384], index: 6, kind: input, shape index: {}]
  %s7 = inlined_call_operand.vmem [shape: f32[1,384], index: 7, kind: input, shape index: {}]
  %s8 = inlined_call_operand.vmem [shape: f32[16,128], index: 8, kind: output, shape index: {}]
  %s9 = sld [smem:[#allocation0]]
  $region42: #{gru221_forward.1} parent=0
    _
  %s11 = ssub.s32 1, %s9
  %s12 = scalar_select 0, %s11, %s9
  // Predicated region
  $region2: #{gru221_forward.1} parent=0 // pred_check
    _
  $region3: #{gru221_forward.1} parent=0 // pred_check_branch
    %14 = sbr.rel (0) target = $region5
  $region4: #{gru221_forward.1} parent=0 // pred_region
    _
  $region5: #{gru221_forward.1} parent=0 // pred_fallthru
    _
  // Predicated region
  $region6: #{gru221_forward.1} parent=0 // pred_check
    _
  $region7: #{gru221_forward.1} parent=0 // pred_check_branch
    %16 = sbr.rel (0) target = $region9
  $region8: #{gru221_forward.1} parent=0 // pred_region
    _
  $region9: #{gru221_forward.1} parent=0 // pred_fallthru
    _
  // Predicated region
  $region10: #{gru221_forward.1} parent=0 // pred_check
    _
  $region11: #{gru221_forward.1} parent=0 // pred_check_branch
    %18 = sbr.rel (0) target = $region13
  $region12: #{gru221_forward.1} parent=0 // pred_region
    _
  $region13: #{gru221_forward.1} parent=0 // pred_fallthru
    _
  // Predicated region
  $region14: #{gru221_forward.1} parent=0 // pred_check
    _
  $region15: #{gru221_forward.1} parent=0 // pred_check_branch
    %20 = sbr.rel (0) target = $region17
  $region16: #{gru221_forward.1} parent=0 // pred_region
    _
  $region17: #{gru221_forward.1} parent=0 // pred_fallthru
    _
  // Predicated region
  $region18: #{gru221_forward.1} parent=0 // pred_check
    _
  $region19: #{gru221_forward.1} parent=0 // pred_check_branch
    %22 = sbr.rel (0) target = $region21
  $region20: #{gru221_forward.1} parent=0 // pred_region
    _
  $region21: #{gru221_forward.1} parent=0 // pred_fallthru
    _
  // Predicated region
  $region22: #{gru221_forward.1} parent=0 // pred_check
    _
  $region23: #{gru221_forward.1} parent=0 // pred_check_branch
    %24 = sbr.rel (0) target = $region25
  $region24: #{gru221_forward.1} parent=0 // pred_region
    _
  $region25: #{gru221_forward.1} parent=0 // pred_fallthru
    _
  // Predicated region
  $region26: #{gru221_forward.1} parent=0 // pred_check
    _
  $region27: #{gru221_forward.1} parent=0 // pred_check_branch
    %26 = sbr.rel (0) target = $region29
  $region28: #{gru221_forward.1} parent=0 // pred_region
    _
  $region29: #{gru221_forward.1} parent=0 // pred_fallthru
    _
  // Predicated region
  $region30: #{gru221_forward.1} parent=0 // pred_check
    _
  $region31: #{gru221_forward.1} parent=0 // pred_check_branch
    %28 = sbr.rel (0) target = $region33
  $region32: #{gru221_forward.1} parent=0 // pred_region
    _
  $region33: #{gru221_forward.1} parent=0 // pred_fallthru
    _
  %v29 = vld [vmem:[%s0] sm:$0xff]
  %v30 = vld [vmem:[%s0 + $0x8] sm:$0xff]
  %v31 = vld [vmem:[%s3] sm:$0xff]
  %v32 = vld [vmem:[%s3 + $0x8] sm:$0xff]
  %v33 = vld [vmem:[%s3 + $0x10] sm:$0xff]
  %v34 = vld [vmem:[%s3 + $0x18] sm:$0xff]
  %v35 = vld [vmem:[%s3 + $0x20] sm:$0xff]
  %v36 = vld [vmem:[%s3 + $0x28] sm:$0xff]
  %v37 = vld [vmem:[%s6] sm:$0x7]
  %v39 = vlaneseq
  %v40 = vshrl.u32 %v39, 7
  %v41 = vsub.s32 0, %v40
  %v42 = vrot.slane %v37, %v41
  %v43 = vlaneseq
  %v44 = vshrl.u32 %v43, 7
  %v45 = vsub.s32 1, %v44
  %v46 = vrot.slane %v37, %v45
  %v47 = vlaneseq
  %v48 = vshrl.u32 %v47, 7
  %v49 = vsub.s32 2, %v48
  %v50 = vrot.slane %v37, %v49
  %vm54 = vcmask 130048
  %v56 = vsel %vm54, %v29, 0
  %v59 = vsel %vm54, %v30, 0
  %61 = vmatprep.subr.mxu0 0.0
  %62 = vmatpush1.msra.mxu0 0.0
  %63 = vmatprep.subr.mxu0 0.0
  %64 = vmatpush1.msra.mxu0 0.0
  %65 = vmatprep.subr.mxu0 0.0
  %66 = vmatpush1.msra.mxu0 0.0
  %67 = vmatprep.subr.mxu0 0.0
  %68 = vmatpush1.msra.mxu0 0.0
  %69 = vmatprep.subr.mxu0 0.0
  %70 = vmatpush1.msra.mxu0 0.0
  %71 = vmatprep.subr.mxu0 0.0
  %72 = vmatpush1.msra.mxu0 0.0
  %73 = vmatprep.subr.mxu0 0.0
  %74 = vmatpush1.msra.mxu0 0.0
  %75 = vmatprep.subr.mxu0 0.0
  %76 = vmatpush1.msra.mxu0 0.0
  %77 = vmatprep.subr.mxu0 0.0
  %78 = vmatpush1.msra.mxu0 0.0
  %79 = vmatprep.subr.mxu0 0.0
  %80 = vmatpush1.msra.mxu0 0.0
  %81 = vmatprep.subr.mxu0 0.0
  %82 = vmatpush1.msra.mxu0 0.0
  %83 = vmatprep.subr.mxu0 0.0
  %84 = vmatpush1.msra.mxu0 0.0
  %85 = vmatprep.subr.mxu0 0.0
  %86 = vmatpush1.msra.mxu0 0.0
  %87 = vmatprep.subr.mxu0 0.0
  %88 = vmatpush1.msra.mxu0 0.0
  %89 = vmatprep.subr.mxu0 %v35
  %90 = vmatpush1.msra.mxu0 %v34
  %91 = vmatprep.subr.mxu0 %v32
  %92 = vmatpush1.msra.mxu0 %v31
  %93 = vmatprep.subr.mxu0 0.0
  %94 = vmatpush2.msra.mxu0 0.0
  %95 = vmatprep.subr.mxu0 0.0
  %96 = vmatpush2.msra.mxu0 0.0
  %97 = vmatprep.subr.mxu0 0.0
  %98 = vmatpush2.msra.mxu0 0.0
  %99 = vmatprep.subr.mxu0 0.0
  %100 = vmatpush2.msra.mxu0 0.0
  %101 = vmatprep.subr.mxu0 0.0
  %102 = vmatpush2.msra.mxu0 0.0
  %103 = vmatprep.subr.mxu0 0.0
  %104 = vmatpush2.msra.mxu0 0.0
  %105 = vmatprep.subr.mxu0 0.0
  %106 = vmatpush2.msra.mxu0 0.0
  %107 = vmatprep.subr.mxu0 0.0
  %108 = vmatpush2.msra.mxu0 0.0
  %109 = vmatprep.subr.mxu0 0.0
  %110 = vmatpush2.msra.mxu0 0.0
  %111 = vmatprep.subr.mxu0 0.0
  %112 = vmatpush2.msra.mxu0 0.0
  %113 = vmatprep.subr.mxu0 0.0
  %114 = vmatpush2.msra.mxu0 0.0
  %115 = vmatprep.subr.mxu0 0.0
  %116 = vmatpush2.msra.mxu0 0.0
  %117 = vmatprep.subr.mxu0 0.0
  %118 = vmatpush2.msra.mxu0 0.0
  %119 = vmatprep.subr.mxu0 0.0
  %120 = vmatpush2.msra.mxu0 0.0
  %121 = vmatprep.subr.mxu0 0.0
  %122 = vmatpush2.msra.mxu0 0.0
  %123 = vmatprep.subr.mxu0 0.0
  %124 = vmatpush2.msra.mxu0 0.0
  %125 = vmatprep.mubr.f32.mxu0 0.0
  %126 = vmatmul.mubr.f32.gmra.mxu0 %v56
  %v127 = vpop.f32.mrf.mxu0
  %v128 = vadd.f32 %v42, %v127
  %v129 = vpop.f32.mrf.mxu0
  %v130 = vadd.f32 %v46, %v129
  %131 = vmatprep.mubr.f32.mxu0 0.0
  %132 = vmatmul.mubr.f32.gmra.mxu0 %v59
  %v133 = vpop.f32.mrf.mxu0
  %v134 = vadd.f32 %v42, %v133
  %v135 = vpop.f32.mrf.mxu0
  %v136 = vadd.f32 %v46, %v135
  %137 = vdwg.mxu0
  %138 = vmatprep.subr.mxu0 0.0
  %139 = vmatpush1.msra.mxu0 0.0
  %140 = vmatprep.subr.mxu0 0.0
  %141 = vmatpush1.msra.mxu0 0.0
  %142 = vmatprep.subr.mxu0 0.0
  %143 = vmatpush1.msra.mxu0 0.0
  %144 = vmatprep.subr.mxu0 0.0
  %145 = vmatpush1.msra.mxu0 0.0
  %146 = vmatprep.subr.mxu0 0.0
  %147 = vmatpush1.msra.mxu0 0.0
  %148 = vmatprep.subr.mxu0 0.0
  %149 = vmatpush1.msra.mxu0 0.0
  %150 = vmatprep.subr.mxu0 0.0
  %151 = vmatpush1.msra.mxu0 0.0
  %152 = vmatprep.subr.mxu0 0.0
  %153 = vmatpush1.msra.mxu0 0.0
  %154 = vmatprep.subr.mxu0 0.0
  %155 = vmatpush1.msra.mxu0 0.0
  %156 = vmatprep.subr.mxu0 0.0
  %157 = vmatpush1.msra.mxu0 0.0
  %158 = vmatprep.subr.mxu0 0.0
  %159 = vmatpush1.msra.mxu0 0.0
  %160 = vmatprep.subr.mxu0 0.0
  %161 = vmatpush1.msra.mxu0 0.0
  %162 = vmatprep.subr.mxu0 0.0
  %163 = vmatpush1.msra.mxu0 0.0
  %164 = vmatprep.subr.mxu0 0.0
  %165 = vmatpush1.msra.mxu0 0.0
  %166 = vmatprep.subr.mxu0 0.0
  %167 = vmatpush1.msra.mxu0 %v36
  %168 = vmatprep.subr.mxu0 0.0
  %169 = vmatpush1.msra.mxu0 %v33
  %170 = vmatprep.subr.mxu0 0.0
  %171 = vmatpush2.msra.mxu0 0.0
  %172 = vmatprep.subr.mxu0 0.0
  %173 = vmatpush2.msra.mxu0 0.0
  %174 = vmatprep.subr.mxu0 0.0
  %175 = vmatpush2.msra.mxu0 0.0
  %176 = vmatprep.subr.mxu0 0.0
  %177 = vmatpush2.msra.mxu0 0.0
  %178 = vmatprep.subr.mxu0 0.0
  %179 = vmatpush2.msra.mxu0 0.0
  %180 = vmatprep.subr.mxu0 0.0
  %181 = vmatpush2.msra.mxu0 0.0
  %182 = vmatprep.subr.mxu0 0.0
  %183 = vmatpush2.msra.mxu0 0.0
  %184 = vmatprep.subr.mxu0 0.0
  %185 = vmatpush2.msra.mxu0 0.0
  %186 = vmatprep.subr.mxu0 0.0
  %187 = vmatpush2.msra.mxu0 0.0
  %188 = vmatprep.subr.mxu0 0.0
  %189 = vmatpush2.msra.mxu0 0.0
  %190 = vmatprep.subr.mxu0 0.0
  %191 = vmatpush2.msra.mxu0 0.0
  %192 = vmatprep.subr.mxu0 0.0
  %193 = vmatpush2.msra.mxu0 0.0
  %194 = vmatprep.subr.mxu0 0.0
  %195 = vmatpush2.msra.mxu0 0.0
  %196 = vmatprep.subr.mxu0 0.0
  %197 = vmatpush2.msra.mxu0 0.0
  %198 = vmatprep.subr.mxu0 0.0
  %199 = vmatpush2.msra.mxu0 0.0
  %200 = vmatprep.subr.mxu0 0.0
  %201 = vmatpush2.msra.mxu0 0.0
  %202 = vmatprep.mubr.f32.mxu0 0.0
  %203 = vmatmul.mubr.f32.gmra.mxu0 %v56
  %v204 = vpop.f32.mrf.mxu0
  %v205 = vadd.f32 %v50, %v204
  %v206 = vpop.f32.mrf.mxu0
  %207 = vmatprep.mubr.f32.mxu0 0.0
  %208 = vmatmul.mubr.f32.gmra.mxu0 %v59
  %v209 = vpop.f32.mrf.mxu0
  %v210 = vadd.f32 %v50, %v209
  %v211 = vpop.f32.mrf.mxu0
  %212 = vdwg.mxu0
  %v213 = vld [vmem:[%s1] sm:$0xff]
  %v214 = vld [vmem:[%s1 + $0x8] sm:$0xff]
  %v215 = vld [vmem:[%s4] sm:$0xff]
  %v216 = vld [vmem:[%s4 + $0x8] sm:$0xff]
  %v217 = vld [vmem:[%s4 + $0x10] sm:$0xff]
  %v218 = vld [vmem:[%s4 + $0x18] sm:$0xff]
  %v219 = vld [vmem:[%s4 + $0x20] sm:$0xff]
  %v220 = vld [vmem:[%s4 + $0x28] sm:$0xff]
  %v221 = vld [vmem:[%s4 + $0x30] sm:$0xff]
  %v222 = vld [vmem:[%s4 + $0x38] sm:$0xff]
  %v223 = vld [vmem:[%s4 + $0x40] sm:$0xff]
  %v224 = vld [vmem:[%s4 + $0x48] sm:$0xff]
  %v225 = vld [vmem:[%s4 + $0x50] sm:$0xff]
  %v226 = vld [vmem:[%s4 + $0x58] sm:$0xff]
  %v227 = vld [vmem:[%s4 + $0x60] sm:$0xff]
  %v228 = vld [vmem:[%s4 + $0x68] sm:$0xff]
  %v229 = vld [vmem:[%s4 + $0x70] sm:$0xff]
  %v230 = vld [vmem:[%s4 + $0x78] sm:$0xff]
  %v231 = vld [vmem:[%s4 + $0x80] sm:$0xff]
  %v232 = vld [vmem:[%s4 + $0x88] sm:$0xff]
  %v233 = vld [vmem:[%s4 + $0x90] sm:$0xff]
  %v234 = vld [vmem:[%s4 + $0x98] sm:$0xff]
  %v235 = vld [vmem:[%s4 + $0xa0] sm:$0xff]
  %v236 = vld [vmem:[%s4 + $0xa8] sm:$0xff]
  %v237 = vld [vmem:[%s4 + $0xb0] sm:$0xff]
  %v238 = vld [vmem:[%s4 + $0xb8] sm:$0xff]
  %v239 = vld [vmem:[%s4 + $0xc0] sm:$0xff]
  %v240 = vld [vmem:[%s4 + $0xc8] sm:$0xff]
  %v241 = vld [vmem:[%s4 + $0xd0] sm:$0xff]
  %v242 = vld [vmem:[%s4 + $0xd8] sm:$0xff]
  %v243 = vld [vmem:[%s4 + $0xe0] sm:$0xff]
  %v244 = vld [vmem:[%s4 + $0xe8] sm:$0xff]
  %v245 = vld [vmem:[%s4 + $0xf0] sm:$0xff]
  %v246 = vld [vmem:[%s4 + $0xf8] sm:$0xff]
  %v247 = vld [vmem:[%s4 + $0x100] sm:$0xff]
  %v248 = vld [vmem:[%s4 + $0x108] sm:$0xff]
  %v249 = vld [vmem:[%s4 + $0x110] sm:$0xff]
  %v250 = vld [vmem:[%s4 + $0x118] sm:$0xff]
  %v251 = vld [vmem:[%s4 + $0x120] sm:$0xff]
  %v252 = vld [vmem:[%s4 + $0x128] sm:$0xff]
  %v253 = vld [vmem:[%s4 + $0x130] sm:$0xff]
  %v254 = vld [vmem:[%s4 + $0x138] sm:$0xff]
  %v255 = vld [vmem:[%s4 + $0x140] sm:$0xff]
  %v256 = vld [vmem:[%s4 + $0x148] sm:$0xff]
  %v257 = vld [vmem:[%s4 + $0x150] sm:$0xff]
  %v258 = vld [vmem:[%s4 + $0x158] sm:$0xff]
  %v259 = vld [vmem:[%s4 + $0x160] sm:$0xff]
  %v260 = vld [vmem:[%s4 + $0x168] sm:$0xff]
  %v261 = vld [vmem:[%s4 + $0x170] sm:$0xff]
  %v262 = vld [vmem:[%s4 + $0x178] sm:$0xff]
  %v263 = vld [vmem:[%s2] sm:$0xff]
  %v264 = vld [vmem:[%s2 + $0x8] sm:$0xff]
  %v265 = vld [vmem:[%s5] sm:$0xff]
  %v266 = vld [vmem:[%s5 + $0x8] sm:$0xff]
  %v267 = vld [vmem:[%s5 + $0x10] sm:$0xff]
  %v268 = vld [vmem:[%s5 + $0x18] sm:$0xff]
  %v269 = vld [vmem:[%s5 + $0x20] sm:$0xff]
  %v270 = vld [vmem:[%s5 + $0x28] sm:$0xff]
  %v271 = vld [vmem:[%s5 + $0x30] sm:$0xff]
  %v272 = vld [vmem:[%s5 + $0x38] sm:$0xff]
  %v273 = vld [vmem:[%s5 + $0x40] sm:$0xff]
  %v274 = vld [vmem:[%s5 + $0x48] sm:$0xff]
  %v275 = vld [vmem:[%s5 + $0x50] sm:$0xff]
  %v276 = vld [vmem:[%s5 + $0x58] sm:$0xff]
  %v277 = vld [vmem:[%s5 + $0x60] sm:$0xff]
  %v278 = vld [vmem:[%s5 + $0x68] sm:$0xff]
  %v279 = vld [vmem:[%s5 + $0x70] sm:$0xff]
  %v280 = vld [vmem:[%s5 + $0x78] sm:$0xff]
  %v281 = vld [vmem:[%s5 + $0x80] sm:$0xff]
  %v282 = vld [vmem:[%s5 + $0x88] sm:$0xff]
  %v283 = vld [vmem:[%s5 + $0x90] sm:$0xff]
  %v284 = vld [vmem:[%s5 + $0x98] sm:$0xff]
  %v285 = vld [vmem:[%s5 + $0xa0] sm:$0xff]
  %v286 = vld [vmem:[%s5 + $0xa8] sm:$0xff]
  %v287 = vld [vmem:[%s5 + $0xb0] sm:$0xff]
  %v288 = vld [vmem:[%s5 + $0xb8] sm:$0xff]
  %v289 = vld [vmem:[%s5 + $0xc0] sm:$0xff]
  %v290 = vld [vmem:[%s5 + $0xc8] sm:$0xff]
  %v291 = vld [vmem:[%s5 + $0xd0] sm:$0xff]
  %v292 = vld [vmem:[%s5 + $0xd8] sm:$0xff]
  %v293 = vld [vmem:[%s5 + $0xe0] sm:$0xff]
  %v294 = vld [vmem:[%s5 + $0xe8] sm:$0xff]
  %v295 = vld [vmem:[%s5 + $0xf0] sm:$0xff]
  %v296 = vld [vmem:[%s5 + $0xf8] sm:$0xff]
  %v297 = vld [vmem:[%s5 + $0x100] sm:$0xff]
  %v298 = vld [vmem:[%s5 + $0x108] sm:$0xff]
  %v299 = vld [vmem:[%s5 + $0x110] sm:$0xff]
  %v300 = vld [vmem:[%s5 + $0x118] sm:$0xff]
  %v301 = vld [vmem:[%s5 + $0x120] sm:$0xff]
  %v302 = vld [vmem:[%s5 + $0x128] sm:$0xff]
  %v303 = vld [vmem:[%s5 + $0x130] sm:$0xff]
  %v304 = vld [vmem:[%s5 + $0x138] sm:$0xff]
  %v305 = vld [vmem:[%s5 + $0x140] sm:$0xff]
  %v306 = vld [vmem:[%s5 + $0x148] sm:$0xff]
  %v307 = vld [vmem:[%s5 + $0x150] sm:$0xff]
  %v308 = vld [vmem:[%s5 + $0x158] sm:$0xff]
  %v309 = vld [vmem:[%s5 + $0x160] sm:$0xff]
  %v310 = vld [vmem:[%s5 + $0x168] sm:$0xff]
  %v311 = vld [vmem:[%s5 + $0x170] sm:$0xff]
  %v312 = vld [vmem:[%s5 + $0x178] sm:$0xff]
  %313 = vmatprep.subr.mxu0 %v311
  %314 = vmatpush1.msra.mxu0 %v310
  %315 = vmatprep.subr.mxu0 %v308
  %316 = vmatpush1.msra.mxu0 %v307
  %317 = vmatprep.subr.mxu0 %v305
  %318 = vmatpush1.msra.mxu0 %v304
  %319 = vmatprep.subr.mxu0 %v302
  %320 = vmatpush1.msra.mxu0 %v301
  %321 = vmatprep.subr.mxu0 %v299
  %322 = vmatpush1.msra.mxu0 %v298
  %323 = vmatprep.subr.mxu0 %v296
  %324 = vmatpush1.msra.mxu0 %v295
  %325 = vmatprep.subr.mxu0 %v293
  %326 = vmatpush1.msra.mxu0 %v292
  %327 = vmatprep.subr.mxu0 %v290
  %328 = vmatpush1.msra.mxu0 %v289
  %329 = vmatprep.subr.mxu0 %v287
  %330 = vmatpush1.msra.mxu0 %v286
  %331 = vmatprep.subr.mxu0 %v284
  %332 = vmatpush1.msra.mxu0 %v283
  %333 = vmatprep.subr.mxu0 %v281
  %334 = vmatpush1.msra.mxu0 %v280
  %335 = vmatprep.subr.mxu0 %v278
  %336 = vmatpush1.msra.mxu0 %v277
  %337 = vmatprep.subr.mxu0 %v275
  %338 = vmatpush1.msra.mxu0 %v274
  %339 = vmatprep.subr.mxu0 %v272
  %340 = vmatpush1.msra.mxu0 %v271
  %341 = vmatprep.subr.mxu0 %v269
  %342 = vmatpush1.msra.mxu0 %v268
  %343 = vmatprep.subr.mxu0 %v266
  %344 = vmatpush1.msra.mxu0 %v265
  %345 = vmatprep.subr.mxu0 0.0
  %346 = vmatpush2.msra.mxu0 0.0
  %347 = vmatprep.subr.mxu0 0.0
  %348 = vmatpush2.msra.mxu0 0.0
  %349 = vmatprep.subr.mxu0 0.0
  %350 = vmatpush2.msra.mxu0 0.0
  %351 = vmatprep.subr.mxu0 0.0
  %352 = vmatpush2.msra.mxu0 0.0
  %353 = vmatprep.subr.mxu0 0.0
  %354 = vmatpush2.msra.mxu0 0.0
  %355 = vmatprep.subr.mxu0 0.0
  %356 = vmatpush2.msra.mxu0 0.0
  %357 = vmatprep.subr.mxu0 0.0
  %358 = vmatpush2.msra.mxu0 0.0
  %359 = vmatprep.subr.mxu0 0.0
  %360 = vmatpush2.msra.mxu0 0.0
  %361 = vmatprep.subr.mxu0 0.0
  %362 = vmatpush2.msra.mxu0 0.0
  %363 = vmatprep.subr.mxu0 0.0
  %364 = vmatpush2.msra.mxu0 0.0
  %365 = vmatprep.subr.mxu0 0.0
  %366 = vmatpush2.msra.mxu0 0.0
  %367 = vmatprep.subr.mxu0 0.0
  %368 = vmatpush2.msra.mxu0 0.0
  %369 = vmatprep.subr.mxu0 0.0
  %370 = vmatpush2.msra.mxu0 0.0
  %371 = vmatprep.subr.mxu0 0.0
  %372 = vmatpush2.msra.mxu0 0.0
  %373 = vmatprep.subr.mxu0 0.0
  %374 = vmatpush2.msra.mxu0 0.0
  %375 = vmatprep.subr.mxu0 0.0
  %376 = vmatpush2.msra.mxu0 0.0
  %377 = vmatprep.mubr.f32.mxu0 0.0
  %378 = vmatmul.mubr.f32.gmra.mxu0 %v263
  %v379 = vpop.f32.mrf.mxu0
  %v380 = vadd.f32 0.0, %v379
  %v381 = vpop.f32.mrf.mxu0
  %v382 = vadd.f32 0.0, %v381
  %383 = vmatprep.mubr.f32.mxu0 0.0
  %384 = vmatmul.mubr.f32.gmra.mxu0 %v264
  %v385 = vpop.f32.mrf.mxu0
  %v386 = vadd.f32 0.0, %v385
  %v387 = vpop.f32.mrf.mxu0
  %v388 = vadd.f32 0.0, %v387
  %389 = vdwg.mxu0
  %390 = vmatprep.subr.mxu0 0.0
  %391 = vmatpush1.msra.mxu0 %v312
  %392 = vmatprep.subr.mxu0 0.0
  %393 = vmatpush1.msra.mxu0 %v309
  %394 = vmatprep.subr.mxu0 0.0
  %395 = vmatpush1.msra.mxu0 %v306
  %396 = vmatprep.subr.mxu0 0.0
  %397 = vmatpush1.msra.mxu0 %v303
  %398 = vmatprep.subr.mxu0 0.0
  %399 = vmatpush1.msra.mxu0 %v300
  %400 = vmatprep.subr.mxu0 0.0
  %401 = vmatpush1.msra.mxu0 %v297
  %402 = vmatprep.subr.mxu0 0.0
  %403 = vmatpush1.msra.mxu0 %v294
  %404 = vmatprep.subr.mxu0 0.0
  %405 = vmatpush1.msra.mxu0 %v291
  %406 = vmatprep.subr.mxu0 0.0
  %407 = vmatpush1.msra.mxu0 %v288
  %408 = vmatprep.subr.mxu0 0.0
  %409 = vmatpush1.msra.mxu0 %v285
  %410 = vmatprep.subr.mxu0 0.0
  %411 = vmatpush1.msra.mxu0 %v282
  %412 = vmatprep.subr.mxu0 0.0
  %413 = vmatpush1.msra.mxu0 %v279
  %414 = vmatprep.subr.mxu0 0.0
  %415 = vmatpush1.msra.mxu0 %v276
  %416 = vmatprep.subr.mxu0 0.0
  %417 = vmatpush1.msra.mxu0 %v273
  %418 = vmatprep.subr.mxu0 0.0
  %419 = vmatpush1.msra.mxu0 %v270
  %420 = vmatprep.subr.mxu0 0.0
  %421 = vmatpush1.msra.mxu0 %v267
  %422 = vmatprep.subr.mxu0 0.0
  %423 = vmatpush2.msra.mxu0 0.0
  %424 = vmatprep.subr.mxu0 0.0
  %425 = vmatpush2.msra.mxu0 0.0
  %426 = vmatprep.subr.mxu0 0.0
  %427 = vmatpush2.msra.mxu0 0.0
  %428 = vmatprep.subr.mxu0 0.0
  %429 = vmatpush2.msra.mxu0 0.0
  %430 = vmatprep.subr.mxu0 0.0
  %431 = vmatpush2.msra.mxu0 0.0
  %432 = vmatprep.subr.mxu0 0.0
  %433 = vmatpush2.msra.mxu0 0.0
  %434 = vmatprep.subr.mxu0 0.0
  %435 = vmatpush2.msra.mxu0 0.0
  %436 = vmatprep.subr.mxu0 0.0
  %437 = vmatpush2.msra.mxu0 0.0
  %438 = vmatprep.subr.mxu0 0.0
  %439 = vmatpush2.msra.mxu0 0.0
  %440 = vmatprep.subr.mxu0 0.0
  %441 = vmatpush2.msra.mxu0 0.0
  %442 = vmatprep.subr.mxu0 0.0
  %443 = vmatpush2.msra.mxu0 0.0
  %444 = vmatprep.subr.mxu0 0.0
  %445 = vmatpush2.msra.mxu0 0.0
  %446 = vmatprep.subr.mxu0 0.0
  %447 = vmatpush2.msra.mxu0 0.0
  %448 = vmatprep.subr.mxu0 0.0
  %449 = vmatpush2.msra.mxu0 0.0
  %450 = vmatprep.subr.mxu0 0.0
  %451 = vmatpush2.msra.mxu0 0.0
  %452 = vmatprep.subr.mxu0 0.0
  %453 = vmatpush2.msra.mxu0 0.0
  %454 = vmatprep.mubr.f32.mxu0 0.0
  %455 = vmatmul.mubr.f32.gmra.mxu0 %v263
  %v456 = vpop.f32.mrf.mxu0
  %v457 = vadd.f32 0.0, %v456
  %v458 = vpop.f32.mrf.mxu0
  %459 = vmatprep.mubr.f32.mxu0 0.0
  %460 = vmatmul.mubr.f32.gmra.mxu0 %v264
  %v461 = vpop.f32.mrf.mxu0
  %v462 = vadd.f32 0.0, %v461
  %v463 = vpop.f32.mrf.mxu0
  %464 = vdwg.mxu0
  %465 = vmatprep.subr.mxu0 %v261
  %466 = vmatpush1.msra.mxu0 %v260
  %467 = vmatprep.subr.mxu0 %v258
  %468 = vmatpush1.msra.mxu0 %v257
  %469 = vmatprep.subr.mxu0 %v255
  %470 = vmatpush1.msra.mxu0 %v254
  %471 = vmatprep.subr.mxu0 %v252
  %472 = vmatpush1.msra.mxu0 %v251
  %473 = vmatprep.subr.mxu0 %v249
  %474 = vmatpush1.msra.mxu0 %v248
  %475 = vmatprep.subr.mxu0 %v246
  %476 = vmatpush1.msra.mxu0 %v245
  %477 = vmatprep.subr.mxu0 %v243
  %478 = vmatpush1.msra.mxu0 %v242
  %479 = vmatprep.subr.mxu0 %v240
  %480 = vmatpush1.msra.mxu0 %v239
  %481 = vmatprep.subr.mxu0 %v237
  %482 = vmatpush1.msra.mxu0 %v236
  %483 = vmatprep.subr.mxu0 %v234
  %484 = vmatpush1.msra.mxu0 %v233
  %485 = vmatprep.subr.mxu0 %v231
  %486 = vmatpush1.msra.mxu0 %v230
  %487 = vmatprep.subr.mxu0 %v228
  %488 = vmatpush1.msra.mxu0 %v227
  %489 = vmatprep.subr.mxu0 %v225
  %490 = vmatpush1.msra.mxu0 %v224
  %491 = vmatprep.subr.mxu0 %v222
  %492 = vmatpush1.msra.mxu0 %v221
  %493 = vmatprep.subr.mxu0 %v219
  %494 = vmatpush1.msra.mxu0 %v218
  %495 = vmatprep.subr.mxu0 %v216
  %496 = vmatpush1.msra.mxu0 %v215
  %497 = vmatprep.subr.mxu0 0.0
  %498 = vmatpush2.msra.mxu0 0.0
  %499 = vmatprep.subr.mxu0 0.0
  %500 = vmatpush2.msra.mxu0 0.0
  %501 = vmatprep.subr.mxu0 0.0
  %502 = vmatpush2.msra.mxu0 0.0
  %503 = vmatprep.subr.mxu0 0.0
  %504 = vmatpush2.msra.mxu0 0.0
  %505 = vmatprep.subr.mxu0 0.0
  %506 = vmatpush2.msra.mxu0 0.0
  %507 = vmatprep.subr.mxu0 0.0
  %508 = vmatpush2.msra.mxu0 0.0
  %509 = vmatprep.subr.mxu0 0.0
  %510 = vmatpush2.msra.mxu0 0.0
  %511 = vmatprep.subr.mxu0 0.0
  %512 = vmatpush2.msra.mxu0 0.0
  %513 = vmatprep.subr.mxu0 0.0
  %514 = vmatpush2.msra.mxu0 0.0
  %515 = vmatprep.subr.mxu0 0.0
  %516 = vmatpush2.msra.mxu0 0.0
  %517 = vmatprep.subr.mxu0 0.0
  %518 = vmatpush2.msra.mxu0 0.0
  %519 = vmatprep.subr.mxu0 0.0
  %520 = vmatpush2.msra.mxu0 0.0
  %521 = vmatprep.subr.mxu0 0.0
  %522 = vmatpush2.msra.mxu0 0.0
  %523 = vmatprep.subr.mxu0 0.0
  %524 = vmatpush2.msra.mxu0 0.0
  %525 = vmatprep.subr.mxu0 0.0
  %526 = vmatpush2.msra.mxu0 0.0
  %527 = vmatprep.subr.mxu0 0.0
  %528 = vmatpush2.msra.mxu0 0.0
  %529 = vmatprep.mubr.f32.mxu0 0.0
  %530 = vmatmul.mubr.f32.gmra.mxu0 %v213
  %v531 = vpop.f32.mrf.mxu0
  %v532 = vadd.f32 %v380, %v531
  %v533 = vpop.f32.mrf.mxu0
  %v534 = vadd.f32 %v382, %v533
  %535 = vmatprep.mubr.f32.mxu0 0.0
  %536 = vmatmul.mubr.f32.gmra.mxu0 %v214
  %v537 = vpop.f32.mrf.mxu0
  %v538 = vadd.f32 %v386, %v537
  %v539 = vpop.f32.mrf.mxu0
  %v540 = vadd.f32 %v388, %v539
  %541 = vdwg.mxu0
  %542 = vmatprep.subr.mxu0 0.0
  %543 = vmatpush1.msra.mxu0 %v262
  %544 = vmatprep.subr.mxu0 0.0
  %545 = vmatpush1.msra.mxu0 %v259
  %546 = vmatprep.subr.mxu0 0.0
  %547 = vmatpush1.msra.mxu0 %v256
  %548 = vmatprep.subr.mxu0 0.0
  %549 = vmatpush1.msra.mxu0 %v253
  %550 = vmatprep.subr.mxu0 0.0
  %551 = vmatpush1.msra.mxu0 %v250
  %552 = vmatprep.subr.mxu0 0.0
  %553 = vmatpush1.msra.mxu0 %v247
  %554 = vmatprep.subr.mxu0 0.0
  %555 = vmatpush1.msra.mxu0 %v244
  %556 = vmatprep.subr.mxu0 0.0
  %557 = vmatpush1.msra.mxu0 %v241
  %558 = vmatprep.subr.mxu0 0.0
  %559 = vmatpush1.msra.mxu0 %v238
  %560 = vmatprep.subr.mxu0 0.0
  %561 = vmatpush1.msra.mxu0 %v235
  %562 = vmatprep.subr.mxu0 0.0
  %563 = vmatpush1.msra.mxu0 %v232
  %564 = vmatprep.subr.mxu0 0.0
  %565 = vmatpush1.msra.mxu0 %v229
  %566 = vmatprep.subr.mxu0 0.0
  %567 = vmatpush1.msra.mxu0 %v226
  %568 = vmatprep.subr.mxu0 0.0
  %569 = vmatpush1.msra.mxu0 %v223
  %570 = vmatprep.subr.mxu0 0.0
  %571 = vmatpush1.msra.mxu0 %v220
  %572 = vmatprep.subr.mxu0 0.0
  %573 = vmatpush1.msra.mxu0 %v217
  %574 = vmatprep.subr.mxu0 0.0
  %575 = vmatpush2.msra.mxu0 0.0
  %576 = vmatprep.subr.mxu0 0.0
  %577 = vmatpush2.msra.mxu0 0.0
  %578 = vmatprep.subr.mxu0 0.0
  %579 = vmatpush2.msra.mxu0 0.0
  %580 = vmatprep.subr.mxu0 0.0
  %581 = vmatpush2.msra.mxu0 0.0
  %582 = vmatprep.subr.mxu0 0.0
  %583 = vmatpush2.msra.mxu0 0.0
  %584 = vmatprep.subr.mxu0 0.0
  %585 = vmatpush2.msra.mxu0 0.0
  %586 = vmatprep.subr.mxu0 0.0
  %587 = vmatpush2.msra.mxu0 0.0
  %588 = vmatprep.subr.mxu0 0.0
  %589 = vmatpush2.msra.mxu0 0.0
  %590 = vmatprep.subr.mxu0 0.0
  %591 = vmatpush2.msra.mxu0 0.0
  %592 = vmatprep.subr.mxu0 0.0
  %593 = vmatpush2.msra.mxu0 0.0
  %594 = vmatprep.subr.mxu0 0.0
  %595 = vmatpush2.msra.mxu0 0.0
  %596 = vmatprep.subr.mxu0 0.0
  %597 = vmatpush2.msra.mxu0 0.0
  %598 = vmatprep.subr.mxu0 0.0
  %599 = vmatpush2.msra.mxu0 0.0
  %600 = vmatprep.subr.mxu0 0.0
  %601 = vmatpush2.msra.mxu0 0.0
  %602 = vmatprep.subr.mxu0 0.0
  %603 = vmatpush2.msra.mxu0 0.0
  %604 = vmatprep.subr.mxu0 0.0
  %605 = vmatpush2.msra.mxu0 0.0
  %606 = vmatprep.mubr.f32.mxu0 0.0
  %607 = vmatmul.mubr.f32.gmra.mxu0 %v213
  %v608 = vpop.f32.mrf.mxu0
  %v609 = vadd.f32 %v457, %v608
  %v610 = vpop.f32.mrf.mxu0
  %611 = vmatprep.mubr.f32.mxu0 0.0
  %612 = vmatmul.mubr.f32.gmra.mxu0 %v214
  %v613 = vpop.f32.mrf.mxu0
  %v614 = vadd.f32 %v462, %v613
  %v615 = vpop.f32.mrf.mxu0
  %616 = vdwg.mxu0
  %v617 = vld [vmem:[%s7] sm:$0x7]
  %v619 = vlaneseq
  %v620 = vshrl.u32 %v619, 7
  %v621 = vsub.s32 0, %v620
  %v622 = vrot.slane %v617, %v621
  %v623 = vlaneseq
  %v624 = vshrl.u32 %v623, 7
  %v625 = vsub.s32 1, %v624
  %v626 = vrot.slane %v617, %v625
  %v627 = vlaneseq
  %v628 = vshrl.u32 %v627, 7
  %v629 = vsub.s32 2, %v628
  %v630 = vrot.slane %v617, %v629
  %v634 = vadd.f32 %v532, %v622
  %v635 = vadd.f32 %v534, %v626
  %v636 = vadd.f32 %v609, %v630
  %v637 = vadd.f32 %v538, %v622
  %v638 = vadd.f32 %v540, %v626
  %v639 = vadd.f32 %v614, %v630
  %v640 = vadd.f32 %v128, %v634
  %v641 = vadd.f32 %v134, %v637
  %v642 = vxor.u32 %v640, 2147483648
  %v643 = vxor.u32 %v641, 2147483648
  %v644 = vmul.f32 %v642, 1.442695
  %v645 = vpow.pop %v644
  %v646 = vmul.f32 %v643, 1.442695
  %v647 = vpow.pop %v646
  %v648 = vadd.f32 %v645, 1.0
  %v649 = vadd.f32 %v647, 1.0
  %v650 = vrcp.pop %v648
  %v651 = vmul.f32 1.0, %v650
  %v652 = vrcp.pop %v649
  %v653 = vmul.f32 1.0, %v652
  %v654 = vadd.f32 %v130, %v635
  %v655 = vadd.f32 %v136, %v638
  %v656 = vxor.u32 %v654, 2147483648
  %v657 = vxor.u32 %v655, 2147483648
  %v658 = vmul.f32 %v656, 1.442695
  %v659 = vpow.pop %v658
  %v660 = vmul.f32 %v657, 1.442695
  %v661 = vpow.pop %v660
  %v662 = vadd.f32 %v659, 1.0
  %v663 = vadd.f32 %v661, 1.0
  %v664 = vrcp.pop %v662
  %v665 = vmul.f32 1.0, %v664
  %v666 = vrcp.pop %v663
  %v667 = vmul.f32 1.0, %v666
  %v668 = vmul.f32 %v651, %v636
  %v669 = vmul.f32 %v653, %v639
  %v670 = vadd.f32 %v205, %v668
  %v671 = vadd.f32 %v210, %v669
  %v672 = vtanh.pop %v670
  %v673 = vtanh.pop %v671
  %v674 = vadd.f32 %v213, %v263
  %v675 = vadd.f32 %v214, %v264
  %v676 = vmul.f32 %v674, 0.5
  %v677 = vmul.f32 %v675, 0.5
  %v678 = vsub.f32 %v676, %v672
  %v679 = vsub.f32 %v677, %v673
  %v680 = vmul.f32 %v665, %v678
  %v681 = vmul.f32 %v667, %v679
  %v682 = vadd.f32 %v672, %v680
  %v683 = vadd.f32 %v673, %v681
  %684 = vst [vmem:[%s8] sm:$0xff] %v682
  %685 = vst [vmem:[%s8 + $0x8] sm:$0xff] %v683
  // Predicated region
  $region34: #{gru221_forward.1} parent=0 // pred_check
    _
  $region35: #{gru221_forward.1} parent=0 // pred_check_branch
    %687 = sbr.rel (0) target = $region37
  $region36: #{gru221_forward.1} parent=0 // pred_region
    _
  $region37: #{gru221_forward.1} parent=0 // pred_fallthru
    _
  // Predicated region
  $region38: #{gru221_forward.1} parent=0 // pred_check
    _
  $region39: #{gru221_forward.1} parent=0 // pred_check_branch
    %689 = sbr.rel (0) target = $region41
  $region40: #{gru221_forward.1} parent=0 // pred_region
    _
  $region41: #{gru221_forward.1} parent=0 // pred_fallthru
    _

</llo_original>
